<compile_context>
chip_gen: v7x
topology: tpu7x:2x2x1
jax: 0.10.0
libtpu: 0.0.40
codegen_flags: <defaults>
</compile_context>

<pallas_src>
import functools

import jax
import jax.numpy as jnp
from jax.experimental import pallas as pl
from jax.experimental.pallas import tpu as pltpu


def _round_up(x, m):
    return (x + m - 1) // m * m


def _conv_matmul_kernel(lhs_ref, rhs_ref, o_ref):
    """One (tm, K) x (K, tn) -> (tm, tn) MXU matmul per grid step.

    lhs_ref: (tm, K)   bf16 im2col patch tile
    rhs_ref: (K, tn)   bf16 weight tile (grid-invariant along the M axis)
    o_ref:   (tm, tn)  f32 output tile (tn is a multiple of 128 -> lane-dense)
    """
    o_ref[...] = jnp.dot(
        lhs_ref[...], rhs_ref[...], preferred_element_type=jnp.float32
    ).astype(o_ref.dtype)


def basic_conv2d(x_nchw, weight_oikk, *, stride=(1, 1), padding=(0, 0),
                 dilation=(1, 1), tm=256, tn=128):
    """Equivalent of BasicConv2d.forward: conv2d with bias=False.

    x_nchw:      (N, Cin, H, W)      float32 (PyTorch layout)
    weight_oikk: (Cout, Cin, kh, kw) float32 (PyTorch layout)
    returns:     (N, Cout, Ho, Wo)   float32 (PyTorch layout)
    """
    n, cin, h, w = x_nchw.shape
    cout, cin_w, kh, kw = weight_oikk.shape
    assert cin == cin_w
    sh, sw = stride
    ph, pw = padding
    dh, dw = dilation

    h_out = (h + 2 * ph - dh * (kh - 1) - 1) // sh + 1
    w_out = (w + 2 * pw - dw * (kw - 1) - 1) // sw + 1

    # ---- wrapper glue (XLA): layout, padding, im2col, weight reshape ----
    x_nhwc = jnp.transpose(x_nchw, (0, 2, 3, 1)).astype(jnp.bfloat16)
    x_pad = jnp.pad(x_nhwc, ((0, 0), (ph, ph), (pw, pw), (0, 0)))

    # im2col: one contiguous shifted slice per tap; strides handled here (in
    # XLA), so the Pallas kernel never does strided / cross-lane gathers.
    taps = []
    for i in range(kh):
        for j in range(kw):
            hs, ws = i * dh, j * dw
            he = hs + sh * (h_out - 1) + 1
            we = ws + sw * (w_out - 1) + 1
            taps.append(x_pad[:, hs:he:sh, ws:we:sw, :])  # (N, Ho, Wo, Cin)
    patches = jnp.concatenate(taps, axis=-1)              # (N, Ho, Wo, kh*kw*Cin)

    k_dim = kh * kw * cin
    m_dim = n * h_out * w_out
    lhs = patches.reshape(m_dim, k_dim)

    # Weights: (O, I, kh, kw) -> (kh, kw, I, O) -> (kh*kw*I, O), bf16, pad O
    # to a multiple of 128 lanes so the output store is lane-dense.
    w_mat = jnp.transpose(weight_oikk, (2, 3, 1, 0)).reshape(k_dim, cout)
    w_mat = w_mat.astype(jnp.bfloat16)
    cout_pad = _round_up(cout, tn)
    w_padded = jnp.pad(w_mat, ((0, 0), (0, cout_pad - cout)))

    # Row (M) tiling; pad M so the grid divides evenly (padded rows sliced off).
    tm_eff = min(tm, _round_up(m_dim, 8))
    m_pad = _round_up(m_dim, tm_eff)
    lhs_padded = jnp.pad(lhs, ((0, m_pad - m_dim), (0, 0)))

    grid = (m_pad // tm_eff, cout_pad // tn)

    out_padded = pl.pallas_call(
        _conv_matmul_kernel,
        out_shape=jax.ShapeDtypeStruct((m_pad, cout_pad), jnp.float32),
        grid_spec=pltpu.PrefetchScalarGridSpec(
            num_scalar_prefetch=0,
            grid=grid,
            in_specs=[
                # (tm, K): K is the full extent (kh*kw*Cin), lane-dense vs Cin=4.
                pl.BlockSpec((tm_eff, k_dim), lambda i, j: (i, 0)),
                # Weight tile: grid-invariant along M (tiny; default buffering
                # is negligible for this operand).
                pl.BlockSpec((k_dim, tn), lambda i, j: (0, j)),
            ],
            out_specs=pl.BlockSpec((tm_eff, tn), lambda i, j: (i, j)),
        ),
        compiler_params=pltpu.CompilerParams(
            dimension_semantics=("parallel", "parallel")),
    )(lhs_padded, w_padded)

    # Strip padding, restore PyTorch NCHW layout.
    out = out_padded[:m_dim, :cout].reshape(n, h_out, w_out, cout)
    return jnp.transpose(out, (0, 3, 1, 2))


if __name__ == "__main__":
    # BasicConv2d(in_channel=4, out_channel=8, kernel_size=3, padding=(1, 1))
    key = jax.random.PRNGKey(0)
    kx, kw_ = jax.random.split(key)

    N, CIN, H, W = 2, 4, 16, 16
    COUT, KH, KW = 8, 3, 3
    stride, padding, dilation = (1, 1), (1, 1), (1, 1)

    x = jax.random.normal(kx, (N, CIN, H, W), dtype=jnp.float32)
    weight = jax.random.normal(kw_, (COUT, CIN, KH, KW), dtype=jnp.float32) * 0.1

    out = basic_conv2d(x, weight, stride=stride, padding=padding,
                       dilation=dilation)
    out = jax.block_until_ready(out)

    # Reference computed on the same bf16-rounded operands (the kernel uses
    # bf16 inputs with exact-in-f32 products and f32 accumulation), so the
    # comparison isolates the conv math rather than the quantization.
    x_ref = x.astype(jnp.bfloat16).astype(jnp.float32)
    w_ref = weight.astype(jnp.bfloat16).astype(jnp.float32)
    ref = jax.lax.conv_general_dilated(
        x_ref, w_ref,
        window_strides=stride,
        padding=[(padding[0], padding[0]), (padding[1], padding[1])],
        rhs_dilation=dilation,
        dimension_numbers=("NCHW", "OIHW", "NCHW"))

    assert out.shape == ref.shape, (out.shape, ref.shape)
    max_err = float(jnp.max(jnp.abs(out - ref)))
    assert jnp.allclose(out, ref, atol=1e-3, rtol=1e-3), f"mismatch: {max_err}"

    print("KERNEL_OK")
</pallas_src>

<mosaic_0001>
module attributes {stable_mosaic.version = 11 : i64} {
  func.func @_conv_matmul_kernel(%arg0: i32, %arg1: i32, %arg2: memref<256x36xbf16, #tpu.memory_space<vmem>>, %arg3: memref<36x128xbf16, #tpu.memory_space<vmem>>, %arg4: memref<256x128xf32, #tpu.memory_space<vmem>>) attributes {dimension_semantics = [#tpu.dimension_semantics<parallel>, #tpu.dimension_semantics<parallel>], iteration_bounds = array<i64: 2, 1>, scalar_prefetch = 0 : i64, scratch_operands = 0 : i64, tpu.core_type = #tpu.core_type<tc>, window_params = [{transform_indices = @transform_0, window_bounds = array<i64: 256, 36>}, {transform_indices = @transform_1, window_bounds = array<i64: 36, 128>}, {transform_indices = @transform_2, window_bounds = array<i64: 256, 128>}]} {
    %c0 = arith.constant 0 : index
    %c0_0 = arith.constant 0 : index
    %0 = vector.load %arg2[%c0, %c0_0] : memref<256x36xbf16, #tpu.memory_space<vmem>>, vector<256x36xbf16>
    %c0_1 = arith.constant 0 : index
    %c0_2 = arith.constant 0 : index
    %1 = vector.load %arg3[%c0_1, %c0_2] : memref<36x128xbf16, #tpu.memory_space<vmem>>, vector<36x128xbf16>
    %cst = arith.constant dense<0.000000e+00> : vector<256x128xf32>
    %2 = tpu.matmul %0, %1, %cst {dimension_numbers = #tpu.dot_dimension_numbers<[1], [0], [0], [1], [0, 0, 1, 1], [], []>} : vector<256x36xbf16>, vector<36x128xbf16>, vector<256x128xf32> -> vector<256x128xf32>
    %c0_3 = arith.constant 0 : index
    %c0_4 = arith.constant 0 : index
    %3 = vector.load %arg4[%c0_3, %c0_4] : memref<256x128xf32, #tpu.memory_space<vmem>>, vector<256x128xf32>
    tpu.vector_store %arg4[%c0_3, %c0_4], %2 {strides = array<i32>} : memref<256x128xf32, #tpu.memory_space<vmem>>, vector<256x128xf32>,
    return
  }
  func.func @transform_0(%arg0: i32, %arg1: i32) -> (i32, i32) {
    %c0_i32 = arith.constant 0 : i32
    %c0_i32_0 = arith.constant 0 : i32
    return %arg0, %c0_i32 : i32, i32
  }
  func.func @transform_1(%arg0: i32, %arg1: i32) -> (i32, i32) {
    %c0_i32 = arith.constant 0 : i32
    %c0_i32_0 = arith.constant 0 : i32
    return %c0_i32, %arg1 : i32, i32
  }
  func.func @transform_2(%arg0: i32, %arg1: i32) -> (i32, i32) {
    %c0_i32 = arith.constant 0 : i32
    return %arg0, %arg1 : i32, i32
  }
}

</mosaic_0001>

<llo_original>
// kernel: tpu_custom_call.1
$region0: #{tpu_custom_call.1}
  #allocation0 [shape = 'u32[]', space=smem, size = 0x4, offset = 0x4, fixed_abs, tag = 'smem constant byte address 0x4 - core index']
  #allocation1 [shape = 'u32[144,128]{1,0:T(1,128)}', space=vmem, size = 0x12000, scoped, tag = 'internal scratch']
  %s0 = inlined_call_operand.vmem [shape: bf16[512,36], index: 0, kind: input, shape index: {}]
  %s1 = inlined_call_operand.vmem [shape: bf16[36,128], index: 1, kind: input, shape index: {}]
  %s2 = inlined_call_operand.hbm [shape: f32[512,128], index: 2, kind: output, shape index: {}]
  %s3 = sld [smem:[#allocation0]]
  $region41: #{tpu_custom_call.1} parent=0
    _
  %s5 = ssub.s32 1, %s3
  %s6 = scalar_select 0, %s5, %s3
  $region1: #{tpu_custom_call.1} parent=0
    #allocation2 [shape = 'u8[262144]{0}', space=vmem, size = 0x40000, scoped, tag = 'output window, operand 0']
    #allocation3 [shape = 's32[2]{0}', space=sflag, size = 0x8, scoped, tag = 'scoped memory for tpu_custom_call.1']
    %7 = vsyncpa [#allocation3], 0
    %s8 = scalar_lea.sflag [#allocation3], 1
    %9 = vsyncpa %s8, 0
    loop: start=0, step=1, limit=4
    $region2: #{tpu_custom_call.1} parent=1 // loop_pre_header
      _
    $region3: #{tpu_custom_call.1} parent=1 // loop_header
      %s11 = sphi 0, %s15
      %p12 = scmp.ge.s32.totalorder %s11, 4
      %s18 = sphi 0, %s30
      %s19 = sphi 0, %s26
      %s20 = sphi 0, %s18
      %s21 = sphi 0, %s19
      %s22 = sphi 0, %s20
      %s23 = sphi 0, %s21
      %s33 = sphi 0, %s35
      %s36 = sphi 0, %s33
      %s37 = sphi 0, %s36
      %s53 = sphi 0, %s37
      %s59 = sphi 0, %s61
      %s62 = sphi 0, %s59
      %s63 = sphi 0, %s62
      %s79 = sphi 0, %s63
      %s87 = sphi 0, %s89
      %s90 = sphi 0, %s87
      %s91 = sphi 0, %s90
      %s107 = sphi 0, %s91
    $region4: #{tpu_custom_call.1} parent=1 // loop_header_branch
      %14 = sbr.rel (%p12) target = $region8
    $region5: #{tpu_custom_call.1} parent=1 // loop_body
      %s16 = ssub.s32 %s11, 1
      %s17 = ssub.s32 %s11, 2
      %s24 = sadd.s32 1, %s19
      %p25 = scmp.ge.s32.totalorder %s24, 1
      %s26 = scalar_select %p25, 0, %s24
      %s27 = sadd.s32 1, %s18
      %s28 = scalar_select %p25, %s27, %s18
      %p29 = scmp.ge.s32.totalorder %s28, 2
      %s30 = scalar_select %p29, 0, %s28
      %s31 = ssub.s32 %s18, %s30
      %p32 = scmp.eq.s32.totalorder %s31, 0
      %s34 = sadd.s32 %s33, 1
      %s35 = scalar_select %p32, %s33, %s34
      %p38 = pneg %p32
      %p39 = scmp.eq.s32.totalorder %s11, 1
      %p40 = por %p38, %p39
      %p41 = scmp.ne.s32.totalorder %s33, %s36
      %p42 = scmp.eq.s32.totalorder %s11, 0
      %p43 = por %p41, %p42
      %p44 = scmp.ne.s32.totalorder %s33, %s36
      %p45 = scmp.eq.s32.totalorder %s16, 1
      %p46 = por %p44, %p45
      %p47 = scmp.ne.s32.totalorder %s36, %s37
      %p48 = scmp.eq.s32.totalorder %s16, 0
      %p49 = por %p47, %p48
      %p50 = scmp.ne.s32.totalorder %s36, %s37
      %p51 = scmp.eq.s32.totalorder %s17, 1
      %p52 = por %p50, %p51
      %p54 = scmp.ne.s32.totalorder %s37, %s53
      %p55 = scmp.eq.s32.totalorder %s17, 0
      %p56 = por %p54, %p55
      %s57 = ssub.s32 %s19, %s26
      %p58 = scmp.eq.s32.totalorder %s57, 0
      %s60 = sadd.s32 %s59, 1
      %s61 = scalar_select %p58, %s59, %s60
      %p64 = pneg %p58
      %p65 = scmp.eq.s32.totalorder %s11, 1
      %p66 = por %p64, %p65
      %p67 = scmp.ne.s32.totalorder %s59, %s62
      %p68 = scmp.eq.s32.totalorder %s11, 0
      %p69 = por %p67, %p68
      %p70 = scmp.ne.s32.totalorder %s59, %s62
      %p71 = scmp.eq.s32.totalorder %s16, 1
      %p72 = por %p70, %p71
      %p73 = scmp.ne.s32.totalorder %s62, %s63
      %p74 = scmp.eq.s32.totalorder %s16, 0
      %p75 = por %p73, %p74
      %p76 = scmp.ne.s32.totalorder %s62, %s63
      %p77 = scmp.eq.s32.totalorder %s17, 1
      %p78 = por %p76, %p77
      %p80 = scmp.ne.s32.totalorder %s63, %s79
      %p81 = scmp.eq.s32.totalorder %s17, 0
      %p82 = por %p80, %p81
      %s83 = ssub.s32 %s18, %s30
      %s84 = ssub.s32 %s19, %s26
      %s85 = sor.u32 %s83, %s84
      %p86 = scmp.eq.s32.totalorder %s85, 0
      %s88 = sadd.s32 %s87, 1
      %s89 = scalar_select %p86, %s87, %s88
      %p92 = pneg %p86
      %p93 = scmp.eq.s32.totalorder %s11, 1
      %p94 = por %p92, %p93
      %p95 = scmp.ne.s32.totalorder %s87, %s90
      %p96 = scmp.eq.s32.totalorder %s11, 0
      %p97 = por %p95, %p96
      %p98 = scmp.ne.s32.totalorder %s87, %s90
      %p99 = scmp.eq.s32.totalorder %s16, 1
      %p100 = por %p98, %p99
      %p101 = scmp.ne.s32.totalorder %s90, %s91
      %p102 = scmp.eq.s32.totalorder %s16, 0
      %p103 = por %p101, %p102
      %p104 = scmp.ne.s32.totalorder %s90, %s91
      %p105 = scmp.eq.s32.totalorder %s17, 1
      %p106 = por %p104, %p105
      %p108 = scmp.ne.s32.totalorder %s91, %s107
      %p109 = scmp.eq.s32.totalorder %s17, 0
      %p110 = por %p108, %p109
      %p111 = scmp.le.s32.totalorder 1, %s11
      %p112 = scmp.lt.s32.totalorder %s11, 3
      %p113 = pnand %p111, %p112
      %p114 = pneg %p113
      // Predicated region
      $region9: #{tpu_custom_call.1} parent=5 // pred_check
        _
      $region10: #{tpu_custom_call.1} parent=5 // pred_check_branch
        %116 = sbr.rel (%p113) target = $region12
      $region11: #{tpu_custom_call.1} parent=5 // pred_region
        %s117 = ssub.s32 %s11, 1
        // Predicated region
        $region13: #{tpu_custom_call.1} parent=11 // pred_check
          %p118 = pneg %p75
        $region14: #{tpu_custom_call.1} parent=11 // pred_check_branch
          %120 = sbr.rel (%p118) target = $region16
        $region15: #{tpu_custom_call.1} parent=11 // pred_region
          %p121 = scmp.lt.s32.totalorder %s21, 0
          %s122 = scalar_select %p121, %s21, 0
          %s123 = smul.addr %s122, 4
          %s124 = scalar_lea.vmem %s1, %s123
        $region16: #{tpu_custom_call.1} parent=11 // pred_fallthru
          _
      $region12: #{tpu_custom_call.1} parent=5 // pred_fallthru
        _
      %p125 = scmp.lt.s32.totalorder %s11, 2
      // Predicated region
      $region17: #{tpu_custom_call.1} parent=5 // pred_check
        %p126 = pneg %p125
      $region18: #{tpu_custom_call.1} parent=5 // pred_check_branch
        %128 = sbr.rel (%p126) target = $region20
      $region19: #{tpu_custom_call.1} parent=5 // pred_region
        // Predicated region
        $region21: #{tpu_custom_call.1} parent=19 // pred_check
          %p129 = pneg %p43
        $region22: #{tpu_custom_call.1} parent=19 // pred_check_branch
          %131 = sbr.rel (%p129) target = $region24
        $region23: #{tpu_custom_call.1} parent=19 // pred_region
          %s132 = smul.u32 32, %s18
          %p133 = scmp.lt.s32.totalorder %s132, 63
          %s134 = scalar_select %p133, %s132, 63
          %s135 = smul.addr %s134, 4
          %s136 = scalar_lea.vmem %s0, %s135
          %s137 = smul.u32 32, %s18
        $region24: #{tpu_custom_call.1} parent=19 // pred_fallthru
          _
      $region20: #{tpu_custom_call.1} parent=5 // pred_fallthru
        _
      %p138 = scmp.le.s32.totalorder 1, %s11
      %p139 = scmp.lt.s32.totalorder %s11, 3
      %p140 = pnand %p138, %p139
      %p141 = pneg %p140
      // Predicated region
      $region25: #{tpu_custom_call.1} parent=5 // pred_check
        _
      $region26: #{tpu_custom_call.1} parent=5 // pred_check_branch
        %143 = sbr.rel (%p140) target = $region28
      $region27: #{tpu_custom_call.1} parent=5 // pred_region
        %s144 = ssub.s32 %s11, 1
        %s145 = smul.u32 32, %s20
        %p146 = scmp.lt.s32.totalorder %s145, 63
        %s147 = scalar_select %p146, %s145, 63
        %s148 = smul.addr %s147, 4
        %s149 = scalar_lea.vmem %s0, %s148
        %p150 = pneg %p49
        %p151 = pneg %p46
        %p152 = scmp.lt.s32.totalorder %s21, 0
        %s153 = scalar_select %p152, %s21, 0
        %s154 = smul.addr %s153, 4
        %s155 = scalar_lea.vmem %s1, %s154
        %p156 = pneg %p75
        %p157 = pneg %p72
        %p158 = pneg %p103
        %p159 = pneg %p100
        %s160 = sand.u32 %s90, 1
        %s161 = scalar_lea.sflag [#allocation3], %s160
        %s162 = sand.u32 %s90, 1
        %s163 = smul.addr %s162, 256
        %s164 = scalar_lea.vmem [#allocation2], %s163
        %s165 = smul.u32 32, %s20
        %p166 = scmp.lt.s32.totalorder %s165, 63
        %s167 = scalar_select %p166, %s165, 63
        %s168 = smul.addr %s167, 4
        %s169 = scalar_lea.vmem %s0, %s168
        %s170 = smul.u32 32, %s20
        %p171 = scmp.lt.s32.totalorder %s21, 0
        %s172 = scalar_select %p171, %s21, 0
        %s173 = smul.addr %s172, 4
        %s174 = scalar_lea.vmem %s1, %s173
        %s175 = smul.u32 32, %s20
        %v177 = vld [vmem:[%s169] sm:$0xf]
        %v178 = vld [vmem:[%s169 + $0x4] sm:$0xf]
        %v179 = vld [vmem:[%s169 + $0x8] sm:$0xf]
        %v180 = vld [vmem:[%s169 + $0xc] sm:$0xf]
        %v181 = vld [vmem:[%s169 + $0x10] sm:$0xf]
        %v182 = vld [vmem:[%s169 + $0x14] sm:$0xf]
        %v183 = vld [vmem:[%s169 + $0x18] sm:$0xf]
        %v184 = vld [vmem:[%s169 + $0x1c] sm:$0xf]
        %v185 = vld [vmem:[%s169 + $0x20] sm:$0xf]
        %v186 = vld [vmem:[%s169 + $0x24] sm:$0xf]
        %v187 = vld [vmem:[%s169 + $0x28] sm:$0xf]
        %v188 = vld [vmem:[%s169 + $0x2c] sm:$0xf]
        %v189 = vld [vmem:[%s169 + $0x30] sm:$0xf]
        %v190 = vld [vmem:[%s169 + $0x34] sm:$0xf]
        %v191 = vld [vmem:[%s169 + $0x38] sm:$0xf]
        %v192 = vld [vmem:[%s169 + $0x3c] sm:$0xf]
        %v193 = vld [vmem:[%s169 + $0x40] sm:$0xf]
        %v194 = vld [vmem:[%s169 + $0x44] sm:$0xf]
        %v195 = vld [vmem:[%s169 + $0x48] sm:$0xf]
        %v196 = vld [vmem:[%s169 + $0x4c] sm:$0xf]
        %v197 = vld [vmem:[%s169 + $0x50] sm:$0xf]
        %v198 = vld [vmem:[%s169 + $0x54] sm:$0xf]
        %v199 = vld [vmem:[%s169 + $0x58] sm:$0xf]
        %v200 = vld [vmem:[%s169 + $0x5c] sm:$0xf]
        %v201 = vld [vmem:[%s169 + $0x60] sm:$0xf]
        %v202 = vld [vmem:[%s169 + $0x64] sm:$0xf]
        %v203 = vld [vmem:[%s169 + $0x68] sm:$0xf]
        %v204 = vld [vmem:[%s169 + $0x6c] sm:$0xf]
        %v205 = vld [vmem:[%s169 + $0x70] sm:$0xf]
        %v206 = vld [vmem:[%s169 + $0x74] sm:$0xf]
        %v207 = vld [vmem:[%s169 + $0x78] sm:$0xf]
        %v208 = vld [vmem:[%s169 + $0x7c] sm:$0xf]
        %v209 = vld [vmem:[%s174] sm:$0xf]
        %v210 = vld [vmem:[%s174 + $0x4] sm:$0xf]
        %v211 = vld [vmem:[%s174 + $0x8] sm:$0xf]
        %v212 = vld [vmem:[%s174 + $0xc] sm:$0xf]
        %v213 = vld [vmem:[%s174 + $0x10] sm:$0x3]
        %v246 = vunpack.c.l.b16 %v177
        %v247 = vunpack.c.l.b16 %v178
        %v248 = vunpack.c.l.b16 %v179
        %v249 = vunpack.c.l.b16 %v180
        %v250 = vunpack.c.l.b16 %v181
        %v251 = vunpack.c.l.b16 %v182
        %v252 = vunpack.c.l.b16 %v183
        %v253 = vunpack.c.l.b16 %v184
        %v254 = vunpack.c.l.b16 %v185
        %v255 = vunpack.c.l.b16 %v186
        %v256 = vunpack.c.l.b16 %v187
        %v257 = vunpack.c.l.b16 %v188
        %v258 = vunpack.c.l.b16 %v189
        %v259 = vunpack.c.l.b16 %v190
        %v260 = vunpack.c.l.b16 %v191
        %v261 = vunpack.c.l.b16 %v192
        %v262 = vunpack.c.l.b16 %v193
        %v263 = vunpack.c.l.b16 %v194
        %v264 = vunpack.c.l.b16 %v195
        %v265 = vunpack.c.l.b16 %v196
        %v266 = vunpack.c.l.b16 %v197
        %v267 = vunpack.c.l.b16 %v198
        %v268 = vunpack.c.l.b16 %v199
        %v269 = vunpack.c.l.b16 %v200
        %v270 = vunpack.c.l.b16 %v201
        %v271 = vunpack.c.l.b16 %v202
        %v272 = vunpack.c.l.b16 %v203
        %v273 = vunpack.c.l.b16 %v204
        %v274 = vunpack.c.l.b16 %v205
        %v275 = vunpack.c.l.b16 %v206
        %v276 = vunpack.c.l.b16 %v207
        %v277 = vunpack.c.l.b16 %v208
        %v278 = vpack.c.b16 %v247, %v246
        %v279 = vpack.c.b16 %v249, %v248
        %v280 = vpack.c.b16 %v251, %v250
        %v281 = vpack.c.b16 %v253, %v252
        %v282 = vpack.c.b16 %v255, %v254
        %v283 = vpack.c.b16 %v257, %v256
        %v284 = vpack.c.b16 %v259, %v258
        %v285 = vpack.c.b16 %v261, %v260
        %v286 = vpack.c.b16 %v263, %v262
        %v287 = vpack.c.b16 %v265, %v264
        %v288 = vpack.c.b16 %v267, %v266
        %v289 = vpack.c.b16 %v269, %v268
        %v290 = vpack.c.b16 %v271, %v270
        %v291 = vpack.c.b16 %v273, %v272
        %v292 = vpack.c.b16 %v275, %v274
        %v293 = vpack.c.b16 %v277, %v276
        %v299 = vunpack.c.l.b16 %v209
        %v300 = vunpack.c.l.b16 %v210
        %v301 = vunpack.c.l.b16 %v211
        %v302 = vunpack.c.l.b16 %v212
        %v303 = vunpack.c.l.b16 %v213
        %v304 = vpack.c.b16 %v300, %v299
        %v305 = vpack.c.b16 %v302, %v301
        %v306 = vpack.c.b16 %v303, %v303
        %vm309 = vcmask 293888
        %v311 = vsel %vm309, %v278, 0
        %v314 = vsel %vm309, %v279, 0
        %v317 = vsel %vm309, %v280, 0
        %v320 = vsel %vm309, %v281, 0
        %v323 = vsel %vm309, %v282, 0
        %v326 = vsel %vm309, %v283, 0
        %v329 = vsel %vm309, %v284, 0
        %v332 = vsel %vm309, %v285, 0
        %v335 = vsel %vm309, %v286, 0
        %v338 = vsel %vm309, %v287, 0
        %v341 = vsel %vm309, %v288, 0
        %v344 = vsel %vm309, %v289, 0
        %v347 = vsel %vm309, %v290, 0
        %v350 = vsel %vm309, %v291, 0
        %v353 = vsel %vm309, %v292, 0
        %v356 = vsel %vm309, %v293, 0
        %vm358 = vcmask 1041408
        %v360 = vsel %vm358, %v306, 0
        %362 = vmatprep.subr.bf16.mxu0 0
        %363 = vmatpush1.bf16.msra.mxu0 %v304
        %364 = vmatprep.subr.bf16.mxu0 0
        %365 = vmatpush1.bf16.msra.mxu0 %v305
        %366 = vmatprep.subr.bf16.mxu0 0
        %367 = vmatpush1.bf16.msra.mxu0 %v360
        %368 = vmatprep.subr.bf16.mxu0 0
        %369 = vmatpush1.bf16.msra.mxu0 0
        %370 = vmatprep.subr.bf16.mxu0 0
        %371 = vmatpush1.bf16.msra.mxu0 0
        %372 = vmatprep.subr.bf16.mxu0 0
        %373 = vmatpush1.bf16.msra.mxu0 0
        %374 = vmatprep.subr.bf16.mxu0 0
        %375 = vmatpush1.bf16.msra.mxu0 0
        %376 = vmatprep.subr.bf16.mxu0 0
        %377 = vmatpush1.bf16.msra.mxu0 0
        %378 = vmatprep.subr.bf16.mxu0 0
        %379 = vmatpush1.bf16.msra.mxu0 0
        %380 = vmatprep.subr.bf16.mxu0 0
        %381 = vmatpush1.bf16.msra.mxu0 0
        %382 = vmatprep.subr.bf16.mxu0 0
        %383 = vmatpush1.bf16.msra.mxu0 0
        %384 = vmatprep.subr.bf16.mxu0 0
        %385 = vmatpush1.bf16.msra.mxu0 0
        %386 = vmatprep.subr.bf16.mxu0 0
        %387 = vmatpush1.bf16.msra.mxu0 0
        %388 = vmatprep.subr.bf16.mxu0 0
        %389 = vmatpush1.bf16.msra.mxu0 0
        %390 = vmatprep.subr.bf16.mxu0 0
        %391 = vmatpush1.bf16.msra.mxu0 0
        %392 = vmatprep.subr.bf16.mxu0 0
        %393 = vmatpush1.bf16.msra.mxu0 0
        %394 = vmatprep.mubr.bf16.mxu0 0
        %395 = vmatmul.mubr.bf16.gmra.mrb[0].mxu0 %v311
        %v396 = vpop.f32.mrb[0].mxu0
        %v397 = vadd.f32 0.0, %v396
        %v398 = vpop.f32.mrb[0].mxu0
        %v399 = vpop.f32.mrb[0].mxu0
        %v400 = vadd.f32 0.0, %v399
        %v401 = vpop.f32.mrb[0].mxu0
        %402 = vmatprep.mubr.bf16.mxu0 0
        %403 = vmatmul.mubr.bf16.gmra.mrb[0].mxu0 %v314
        %v404 = vpop.f32.mrb[0].mxu0
        %v405 = vadd.f32 0.0, %v404
        %v406 = vpop.f32.mrb[0].mxu0
        %v407 = vpop.f32.mrb[0].mxu0
        %v408 = vadd.f32 0.0, %v407
        %v409 = vpop.f32.mrb[0].mxu0
        %410 = vmatprep.mubr.bf16.mxu0 0
        %411 = vmatmul.mubr.bf16.gmra.mrb[0].mxu0 %v317
        %v412 = vpop.f32.mrb[0].mxu0
        %v413 = vadd.f32 0.0, %v412
        %v414 = vpop.f32.mrb[0].mxu0
        %v415 = vpop.f32.mrb[0].mxu0
        %v416 = vadd.f32 0.0, %v415
        %v417 = vpop.f32.mrb[0].mxu0
        %418 = vmatprep.mubr.bf16.mxu0 0
        %419 = vmatmul.mubr.bf16.gmra.mrb[0].mxu0 %v320
        %v420 = vpop.f32.mrb[0].mxu0
        %v421 = vadd.f32 0.0, %v420
        %v422 = vpop.f32.mrb[0].mxu0
        %v423 = vpop.f32.mrb[0].mxu0
        %v424 = vadd.f32 0.0, %v423
        %v425 = vpop.f32.mrb[0].mxu0
        %426 = vmatprep.mubr.bf16.mxu0 0
        %427 = vmatmul.mubr.bf16.gmra.mrb[0].mxu0 %v323
        %v428 = vpop.f32.mrb[0].mxu0
        %v429 = vadd.f32 0.0, %v428
        %v430 = vpop.f32.mrb[0].mxu0
        %v431 = vpop.f32.mrb[0].mxu0
        %v432 = vadd.f32 0.0, %v431
        %v433 = vpop.f32.mrb[0].mxu0
        %434 = vmatprep.mubr.bf16.mxu0 0
        %435 = vmatmul.mubr.bf16.gmra.mrb[0].mxu0 %v326
        %v436 = vpop.f32.mrb[0].mxu0
        %v437 = vadd.f32 0.0, %v436
        %v438 = vpop.f32.mrb[0].mxu0
        %v439 = vpop.f32.mrb[0].mxu0
        %v440 = vadd.f32 0.0, %v439
        %v441 = vpop.f32.mrb[0].mxu0
        %442 = vmatprep.mubr.bf16.mxu0 0
        %443 = vmatmul.mubr.bf16.gmra.mrb[0].mxu0 %v329
        %v444 = vpop.f32.mrb[0].mxu0
        %v445 = vadd.f32 0.0, %v444
        %v446 = vpop.f32.mrb[0].mxu0
        %v447 = vpop.f32.mrb[0].mxu0
        %v448 = vadd.f32 0.0, %v447
        %v449 = vpop.f32.mrb[0].mxu0
        %450 = vmatprep.mubr.bf16.mxu0 0
        %451 = vmatmul.mubr.bf16.gmra.mrb[0].mxu0 %v332
        %v452 = vpop.f32.mrb[0].mxu0
        %v453 = vadd.f32 0.0, %v452
        %v454 = vpop.f32.mrb[0].mxu0
        %v455 = vpop.f32.mrb[0].mxu0
        %v456 = vadd.f32 0.0, %v455
        %v457 = vpop.f32.mrb[0].mxu0
        %458 = vmatprep.mubr.bf16.mxu0 0
        %459 = vmatmul.mubr.bf16.gmra.mrb[0].mxu0 %v335
        %v460 = vpop.f32.mrb[0].mxu0
        %v461 = vadd.f32 0.0, %v460
        %v462 = vpop.f32.mrb[0].mxu0
        %v463 = vpop.f32.mrb[0].mxu0
        %v464 = vadd.f32 0.0, %v463
        %v465 = vpop.f32.mrb[0].mxu0
        %466 = vmatprep.mubr.bf16.mxu0 0
        %467 = vmatmul.mubr.bf16.gmra.mrb[0].mxu0 %v338
        %v468 = vpop.f32.mrb[0].mxu0
        %v469 = vadd.f32 0.0, %v468
        %v470 = vpop.f32.mrb[0].mxu0
        %v471 = vpop.f32.mrb[0].mxu0
        %v472 = vadd.f32 0.0, %v471
        %v473 = vpop.f32.mrb[0].mxu0
        %474 = vmatprep.mubr.bf16.mxu0 0
        %475 = vmatmul.mubr.bf16.gmra.mrb[0].mxu0 %v341
        %v476 = vpop.f32.mrb[0].mxu0
        %v477 = vadd.f32 0.0, %v476
        %v478 = vpop.f32.mrb[0].mxu0
        %v479 = vpop.f32.mrb[0].mxu0
        %v480 = vadd.f32 0.0, %v479
        %v481 = vpop.f32.mrb[0].mxu0
        %482 = vmatprep.mubr.bf16.mxu0 0
        %483 = vmatmul.mubr.bf16.gmra.mrb[0].mxu0 %v344
        %v484 = vpop.f32.mrb[0].mxu0
        %v485 = vadd.f32 0.0, %v484
        %v486 = vpop.f32.mrb[0].mxu0
        %v487 = vpop.f32.mrb[0].mxu0
        %v488 = vadd.f32 0.0, %v487
        %v489 = vpop.f32.mrb[0].mxu0
        %490 = vmatprep.mubr.bf16.mxu0 0
        %491 = vmatmul.mubr.bf16.gmra.mrb[0].mxu0 %v347
        %v492 = vpop.f32.mrb[0].mxu0
        %v493 = vadd.f32 0.0, %v492
        %v494 = vpop.f32.mrb[0].mxu0
        %v495 = vpop.f32.mrb[0].mxu0
        %v496 = vadd.f32 0.0, %v495
        %v497 = vpop.f32.mrb[0].mxu0
        %498 = vmatprep.mubr.bf16.mxu0 0
        %499 = vmatmul.mubr.bf16.gmra.mrb[0].mxu0 %v350
        %v500 = vpop.f32.mrb[0].mxu0
        %v501 = vadd.f32 0.0, %v500
        %v502 = vpop.f32.mrb[0].mxu0
        %v503 = vpop.f32.mrb[0].mxu0
        %v504 = vadd.f32 0.0, %v503
        %v505 = vpop.f32.mrb[0].mxu0
        %506 = vmatprep.mubr.bf16.mxu0 0
        %507 = vmatmul.mubr.bf16.gmra.mrb[0].mxu0 %v353
        %v508 = vpop.f32.mrb[0].mxu0
        %v509 = vadd.f32 0.0, %v508
        %v510 = vpop.f32.mrb[0].mxu0
        %v511 = vpop.f32.mrb[0].mxu0
        %v512 = vadd.f32 0.0, %v511
        %v513 = vpop.f32.mrb[0].mxu0
        %514 = vmatprep.mubr.bf16.mxu0 0
        %515 = vmatmul.mubr.bf16.gmra.mrb[0].mxu0 %v356
        %v516 = vpop.f32.mrb[0].mxu0
        %v517 = vadd.f32 0.0, %v516
        %v518 = vpop.f32.mrb[0].mxu0
        %v519 = vpop.f32.mrb[0].mxu0
        %v520 = vadd.f32 0.0, %v519
        %v521 = vpop.f32.mrb[0].mxu0
        %522 = vdwg.mxu0
        %523 = vst [vmem:[%s164] sm:$0xff] %v397
        %524 = vst [vmem:[%s164 + $0x8] sm:$0xff] %v400
        %525 = vst [vmem:[%s164 + $0x10] sm:$0xff] %v405
        %526 = vst [vmem:[%s164 + $0x18] sm:$0xff] %v408
        %527 = vst [vmem:[%s164 + $0x20] sm:$0xff] %v413
        %528 = vst [vmem:[%s164 + $0x28] sm:$0xff] %v416
        %529 = vst [vmem:[%s164 + $0x30] sm:$0xff] %v421
        %530 = vst [vmem:[%s164 + $0x38] sm:$0xff] %v424
        %531 = vst [vmem:[%s164 + $0x40] sm:$0xff] %v429
        %532 = vst [vmem:[%s164 + $0x48] sm:$0xff] %v432
        %533 = vst [vmem:[%s164 + $0x50] sm:$0xff] %v437
        %534 = vst [vmem:[%s164 + $0x58] sm:$0xff] %v440
        %535 = vst [vmem:[%s164 + $0x60] sm:$0xff] %v445
        %536 = vst [vmem:[%s164 + $0x68] sm:$0xff] %v448
        %537 = vst [vmem:[%s164 + $0x70] sm:$0xff] %v453
        %538 = vst [vmem:[%s164 + $0x78] sm:$0xff] %v456
        %539 = vst [vmem:[%s164 + $0x80] sm:$0xff] %v461
        %540 = vst [vmem:[%s164 + $0x88] sm:$0xff] %v464
        %541 = vst [vmem:[%s164 + $0x90] sm:$0xff] %v469
        %542 = vst [vmem:[%s164 + $0x98] sm:$0xff] %v472
        %543 = vst [vmem:[%s164 + $0xa0] sm:$0xff] %v477
        %544 = vst [vmem:[%s164 + $0xa8] sm:$0xff] %v480
        %545 = vst [vmem:[%s164 + $0xb0] sm:$0xff] %v485
        %546 = vst [vmem:[%s164 + $0xb8] sm:$0xff] %v488
        %547 = vst [vmem:[%s164 + $0xc0] sm:$0xff] %v493
        %548 = vst [vmem:[%s164 + $0xc8] sm:$0xff] %v496
        %549 = vst [vmem:[%s164 + $0xd0] sm:$0xff] %v501
        %550 = vst [vmem:[%s164 + $0xd8] sm:$0xff] %v504
        %551 = vst [vmem:[%s164 + $0xe0] sm:$0xff] %v509
        %552 = vst [vmem:[%s164 + $0xe8] sm:$0xff] %v512
        %553 = vst [vmem:[%s164 + $0xf0] sm:$0xff] %v517
        %554 = vst [vmem:[%s164 + $0xf8] sm:$0xff] %v520
        %s555 = sand.u32 %s90, 1
        %s556 = scalar_lea.sflag [#allocation3], %s555
        %s557 = sand.u32 %s90, 1
        %s558 = smul.addr %s557, 256
        %s559 = scalar_lea.vmem [#allocation2], %s558
        // Predicated region
        $region29: #{tpu_custom_call.1} parent=27 // pred_check
          %p560 = pneg %p100
        $region30: #{tpu_custom_call.1} parent=27 // pred_check_branch
          %562 = sbr.rel (%p560) target = $region32
        $region31: #{tpu_custom_call.1} parent=27 // pred_region
          %s563 = smul.u32 32, %s20
          %s565 = ssub.s32 4096, 4096
          %566 = vsyncadd %s556, %s565
          %s567 = sadd.s32 %s21, %s563
          %s568 = smul.addr %s567, 128
          %s569 = scalar_lea.hbm %s2, %s568
          %s570 = sshll.u32 %s559, 4
          %s571 = int_to_ptr.vmem [resolvable:$true] %s570
          %576 = dma.vmem_to_hbm [thread:$0]  %s571, 4096, %s569, %s556, 128, 128, 8
        $region32: #{tpu_custom_call.1} parent=27 // pred_fallthru
          _
      $region28: #{tpu_custom_call.1} parent=5 // pred_fallthru
        _
      %p577 = scmp.le.s32.totalorder 2, %s11
      // Predicated region
      $region33: #{tpu_custom_call.1} parent=5 // pred_check
        %p578 = pneg %p577
      $region34: #{tpu_custom_call.1} parent=5 // pred_check_branch
        %580 = sbr.rel (%p578) target = $region36
      $region35: #{tpu_custom_call.1} parent=5 // pred_region
        %s581 = ssub.s32 %s11, 2
        // Predicated region
        $region37: #{tpu_custom_call.1} parent=35 // pred_check
          %p582 = pneg %p106
        $region38: #{tpu_custom_call.1} parent=35 // pred_check_branch
          %584 = sbr.rel (%p582) target = $region40
        $region39: #{tpu_custom_call.1} parent=35 // pred_region
          %s585 = sand.u32 %s91, 1
          %s586 = scalar_lea.sflag [#allocation3], %s585
          %s587 = sand.u32 %s91, 1
          %s588 = smul.addr %s587, 256
          %s589 = scalar_lea.vmem [#allocation2], %s588
          %590 = dma.done %s586, 4096
        $region40: #{tpu_custom_call.1} parent=35 // pred_fallthru
          _
      $region36: #{tpu_custom_call.1} parent=5 // pred_fallthru
        _
    $region6: #{tpu_custom_call.1} parent=1 // loop_footer
      %s15 = sadd.s32 1, %s11
    $region7: #{tpu_custom_call.1} parent=1 // loop_footer_branch
      %10 = sbr.rel target = $region3
    $region8: #{tpu_custom_call.1} parent=1 // loop_exit
      _
    %591 = vsyncpa [#allocation3], 1
    %s592 = scalar_lea.sflag [#allocation3], 1
    %593 = vsyncpa %s592, 1

</llo_original>
